<compile_context>
chip_gen: v5e
topology: v5e:2x2
jax: 0.10.0
libtpu: 0.0.40
codegen_flags: <defaults>
</compile_context>

<pallas_src>
import jax
import jax.numpy as jnp
from jax.experimental import pallas as pl
from jax.experimental.pallas import tpu as pltpu

EPS = 1e-6  # matches LayerNorm((768,), eps=1e-06)


def layernorm_kernel(x_ref, gamma_ref, beta_ref, o_ref):
    # x_ref: (R, C); normalize each row over C.
    x = x_ref[...]
    if x.dtype != jnp.float32:
        x = x.astype(jnp.float32)
    c = x.shape[-1]
    inv_c = 1.0 / c

    # Mean, then mean-subtracted variance (numerically robust, matches torch).
    mean = jnp.sum(x, axis=-1, keepdims=True) * inv_c
    xc = x - mean
    var = jnp.sum(xc * xc, axis=-1, keepdims=True) * inv_c
    inv = jax.lax.rsqrt(var + EPS)  # EUP slot, effectively free here

    gamma = gamma_ref[...]  # (1, C)
    beta = beta_ref[...]    # (1, C)
    if gamma.dtype != jnp.float32:
        gamma = gamma.astype(jnp.float32)
    if beta.dtype != jnp.float32:
        beta = beta.astype(jnp.float32)

    y = xc * inv * gamma + beta
    o_ref[...] = y.astype(o_ref.dtype)


def layernorm_pallas(x, gamma, beta):
    """x: (..., C); gamma, beta: (C,). Returns same shape/dtype as x."""
    orig_shape = x.shape
    C = orig_shape[-1]
    # Contiguous reshape -> bitcast in XLA, no extra HBM traffic.
    x2d = x.reshape(-1, C)

    gamma2d = gamma.reshape(1, C)
    beta2d = beta.reshape(1, C)

    out = pl.pallas_call(
        layernorm_kernel,
        out_shape=jax.ShapeDtypeStruct(x2d.shape, x.dtype),
        # No grid: single-shot kernel, whole arrays resident in VMEM.
        # Full-array blocks; the partial final sublane group just uses a
        # masked store, which is cheaper than padding in the wrapper.
        in_specs=[
            pl.BlockSpec(memory_space=pltpu.MemorySpace.VMEM),
            pl.BlockSpec(memory_space=pltpu.MemorySpace.VMEM),
            pl.BlockSpec(memory_space=pltpu.MemorySpace.VMEM),
        ],
        out_specs=pl.BlockSpec(memory_space=pltpu.MemorySpace.VMEM),
    )(x2d, gamma2d, beta2d)

    return out.reshape(orig_shape)


if __name__ == "__main__":
    key = jax.random.PRNGKey(0)
    k_x, k_g, k_b = jax.random.split(key, 3)

    # Shapes consistent with the module: x203 ~ [1, 7, 7, 768], LayerNorm((768,))
    x = jax.random.normal(k_x, (1, 7, 7, 768), dtype=jnp.float32)
    # PyTorch default affine init is ones/zeros; perturb so the affine path is
    # actually exercised.
    gamma = jnp.ones((768,), jnp.float32) + 0.01 * jax.random.normal(
        k_g, (768,), jnp.float32
    )
    beta = 0.01 * jax.random.normal(k_b, (768,), jnp.float32)

    y = layernorm_pallas(x, gamma, beta)
    jax.block_until_ready(y)

    # Reference check in plain JAX (same semantics as torch.nn.LayerNorm, eps=1e-6).
    mean = jnp.mean(x, axis=-1, keepdims=True)
    var = jnp.mean((x - mean) ** 2, axis=-1, keepdims=True)
    ref = (x - mean) / jnp.sqrt(var + EPS) * gamma + beta
    assert jnp.allclose(y, ref, atol=1e-4, rtol=1e-4), "mismatch vs reference"

    print("KERNEL_OK")
</pallas_src>

<mosaic_0001>
module attributes {stable_mosaic.version = 11 : i64} {
  func.func @layernorm_kernel(%arg0: memref<49x768xf32, #tpu.memory_space<vmem>>, %arg1: memref<1x768xf32, #tpu.memory_space<vmem>>, %arg2: memref<1x768xf32, #tpu.memory_space<vmem>>, %arg3: memref<49x768xf32, #tpu.memory_space<vmem>>) attributes {dimension_semantics = [], scalar_prefetch = 0 : i64, scratch_operands = 0 : i64, tpu.core_type = #tpu.core_type<tc>} {
    %c0 = arith.constant 0 : index
    %c0_0 = arith.constant 0 : index
    %0 = vector.load %arg0[%c0, %c0_0] : memref<49x768xf32, #tpu.memory_space<vmem>>, vector<49x768xf32>
    %cst = arith.constant dense<0.000000e+00> : vector<49xf32>
    %1 = vector.multi_reduction <add>, %0, %cst [1] : vector<49x768xf32> to vector<49xf32>
    %2 = vector.shape_cast %1 : vector<49xf32> to vector<49x1xf32>
    %cst_1 = arith.constant 0.00130208337 : f32
    %3 = vector.broadcast %cst_1 : f32 to vector<49x1xf32>
    %4 = arith.mulf %2, %3 : vector<49x1xf32>
    %5 = vector.broadcast %4 : vector<49x1xf32> to vector<49x768xf32>
    %6 = arith.subf %0, %5 : vector<49x768xf32>
    %7 = arith.mulf %6, %6 : vector<49x768xf32>
    %cst_2 = arith.constant dense<0.000000e+00> : vector<49xf32>
    %8 = vector.multi_reduction <add>, %7, %cst_2 [1] : vector<49x768xf32> to vector<49xf32>
    %9 = vector.shape_cast %8 : vector<49xf32> to vector<49x1xf32>
    %cst_3 = arith.constant 0.00130208337 : f32
    %10 = vector.broadcast %cst_3 : f32 to vector<49x1xf32>
    %11 = arith.mulf %9, %10 : vector<49x1xf32>
    %cst_4 = arith.constant 9.99999997E-7 : f32
    %12 = vector.broadcast %cst_4 : f32 to vector<49x1xf32>
    %13 = arith.addf %11, %12 : vector<49x1xf32>
    %14 = math.rsqrt %13 : vector<49x1xf32>
    %c0_5 = arith.constant 0 : index
    %c0_6 = arith.constant 0 : index
    %15 = vector.load %arg1[%c0_5, %c0_6] : memref<1x768xf32, #tpu.memory_space<vmem>>, vector<1x768xf32>
    %c0_7 = arith.constant 0 : index
    %c0_8 = arith.constant 0 : index
    %16 = vector.load %arg2[%c0_7, %c0_8] : memref<1x768xf32, #tpu.memory_space<vmem>>, vector<1x768xf32>
    %17 = vector.broadcast %14 : vector<49x1xf32> to vector<49x768xf32>
    %18 = arith.mulf %6, %17 : vector<49x768xf32>
    %19 = vector.broadcast %15 : vector<1x768xf32> to vector<49x768xf32>
    %20 = arith.mulf %18, %19 : vector<49x768xf32>
    %21 = vector.broadcast %16 : vector<1x768xf32> to vector<49x768xf32>
    %22 = arith.addf %20, %21 : vector<49x768xf32>
    %c0_9 = arith.constant 0 : index
    %c0_10 = arith.constant 0 : index
    %23 = vector.load %arg3[%c0_9, %c0_10] : memref<49x768xf32, #tpu.memory_space<vmem>>, vector<49x768xf32>
    tpu.vector_store %arg3[%c0_9, %c0_10], %22 {strides = array<i32>} : memref<49x768xf32, #tpu.memory_space<vmem>>, vector<49x768xf32>,
    return
  }
}

</mosaic_0001>

<llo_original>
// kernel: tpu_custom_call.1
$region0: #{tpu_custom_call.1}
  #allocation0 [shape = 'u32[]', space=smem, size = 0x4, offset = 0x4, fixed_abs, tag = 'smem constant byte address 0x4 - core index']
  #allocation1 [shape = 'u32[72,128]{1,0:T(1,128)}', space=vmem, size = 0x9000, scoped, tag = 'internal scratch']
  %s0 = inlined_call_operand.hbm [shape: f32[49,768], index: 0, kind: input, shape index: {}]
  %s1 = inlined_call_operand.hbm [shape: f32[1,768], index: 1, kind: input, shape index: {}]
  %s2 = inlined_call_operand.hbm [shape: f32[1,768], index: 2, kind: input, shape index: {}]
  %s3 = inlined_call_operand.hbm [shape: f32[49,768], index: 3, kind: output, shape index: {}]
  %s4 = sld [smem:[#allocation0]]
  $region34: #{tpu_custom_call.1} parent=0
    _
  %s6 = ssub.s32 1, %s4
  %s7 = scalar_select 0, %s6, %s4
  $region1: #{tpu_custom_call.1} parent=0
    #allocation2 [shape = 'u8[172032]{0}', space=vmem, size = 0x2a000, scoped, tag = 'input window, operand 0, single buffered']
    #allocation3 [shape = 's32[1]{0}', space=sflag, size = 0x4, scoped, tag = 'scoped memory for tpu_custom_call.1']
    #allocation4 [shape = 's32[1]{0}', space=sflag, size = 0x4, scoped, tag = 'scoped memory for tpu_custom_call.1']
    #allocation5 [shape = 'u8[3072]{0}', space=vmem, size = 0xc00, scoped, tag = 'input window, operand 1, single buffered']
    #allocation6 [shape = 's32[1]{0}', space=sflag, size = 0x4, scoped, tag = 'scoped memory for tpu_custom_call.1']
    #allocation7 [shape = 'u8[3072]{0}', space=vmem, size = 0xc00, scoped, tag = 'input window, operand 2, single buffered']
    #allocation8 [shape = 'u8[172032]{0}', space=vmem, size = 0x2a000, scoped, tag = 'output window, operand 0, single buffered']
    %8 = vsyncpa [#allocation3], 0
    %9 = vsyncpa [#allocation6], 0
    %10 = vsyncpa [#allocation4], 0
    // Predicated region
    $region2: #{tpu_custom_call.1} parent=1 // pred_check
      _
    $region3: #{tpu_custom_call.1} parent=1 // pred_check_branch
      %12 = sbr.rel (0) target = $region5
    $region4: #{tpu_custom_call.1} parent=1 // pred_region
      %14 = vsyncadd [#allocation3], 0
      %s15 = sshll.u32 %s0, 4
      %s16 = int_to_ptr.hbm [resolvable:$true] %s15
      %s17 = sshll.u32 [#allocation2], 4
      %s18 = int_to_ptr.vmem [resolvable:$true] %s17
      %23 = dma.hbm_to_vmem [thread:$0]  %s16, 5376, %s18, [#allocation3], 768, 768, 48
    $region5: #{tpu_custom_call.1} parent=1 // pred_fallthru
      _
    // Predicated region
    $region6: #{tpu_custom_call.1} parent=1 // pred_check
      _
    $region7: #{tpu_custom_call.1} parent=1 // pred_check_branch
      %25 = sbr.rel (0) target = $region9
    $region8: #{tpu_custom_call.1} parent=1 // pred_region
      %27 = vsyncadd [#allocation6], 0
      %s29 = sshll.u32 %s1, 4
      %s30 = int_to_ptr.hbm [resolvable:$true] %s29
      %s31 = sshll.u32 [#allocation5], 4
      %s32 = int_to_ptr.vmem [resolvable:$true] %s31
      %34 = dma.hbm_to_vmem [thread:$0]  %s30, 96, %s32, [#allocation6]
    $region9: #{tpu_custom_call.1} parent=1 // pred_fallthru
      _
    // Predicated region
    $region10: #{tpu_custom_call.1} parent=1 // pred_check
      _
    $region11: #{tpu_custom_call.1} parent=1 // pred_check_branch
      %36 = sbr.rel (0) target = $region13
    $region12: #{tpu_custom_call.1} parent=1 // pred_region
      %38 = vsyncadd [#allocation6], 0
      %s40 = sshll.u32 %s2, 4
      %s41 = int_to_ptr.hbm [resolvable:$true] %s40
      %s42 = sshll.u32 [#allocation7], 4
      %s43 = int_to_ptr.vmem [resolvable:$true] %s42
      %45 = dma.hbm_to_vmem [thread:$0]  %s41, 96, %s43, [#allocation6]
    $region13: #{tpu_custom_call.1} parent=1 // pred_fallthru
      _
    // Predicated region
    $region14: #{tpu_custom_call.1} parent=1 // pred_check
      _
    $region15: #{tpu_custom_call.1} parent=1 // pred_check_branch
      %47 = sbr.rel (0) target = $region17
    $region16: #{tpu_custom_call.1} parent=1 // pred_region
      %49 = dma.done [#allocation3], 5376
    $region17: #{tpu_custom_call.1} parent=1 // pred_fallthru
      _
    // Predicated region
    $region18: #{tpu_custom_call.1} parent=1 // pred_check
      _
    $region19: #{tpu_custom_call.1} parent=1 // pred_check_branch
      %51 = sbr.rel (0) target = $region21
    $region20: #{tpu_custom_call.1} parent=1 // pred_region
      %53 = dma.done [#allocation6], 96
    $region21: #{tpu_custom_call.1} parent=1 // pred_fallthru
      _
    // Predicated region
    $region22: #{tpu_custom_call.1} parent=1 // pred_check
      _
    $region23: #{tpu_custom_call.1} parent=1 // pred_check_branch
      %55 = sbr.rel (0) target = $region25
    $region24: #{tpu_custom_call.1} parent=1 // pred_region
      %57 = dma.done [#allocation6], 96
    $region25: #{tpu_custom_call.1} parent=1 // pred_fallthru
      _
    %v58 = vld [vmem:[#allocation2] sm:$0xff]
    %v59 = vld [vmem:[#allocation2 + $0x8] sm:$0xff]
    %v60 = vld [vmem:[#allocation2 + $0x10] sm:$0xff]
    %v61 = vld [vmem:[#allocation2 + $0x18] sm:$0xff]
    %v62 = vld [vmem:[#allocation2 + $0x20] sm:$0xff]
    %v63 = vld [vmem:[#allocation2 + $0x28] sm:$0xff]
    %v64 = vld [vmem:[#allocation2 + $0x30] sm:$0xff]
    %v65 = vld [vmem:[#allocation2 + $0x38] sm:$0xff]
    %v66 = vld [vmem:[#allocation2 + $0x40] sm:$0xff]
    %v67 = vld [vmem:[#allocation2 + $0x48] sm:$0xff]
    %v68 = vld [vmem:[#allocation2 + $0x50] sm:$0xff]
    %v69 = vld [vmem:[#allocation2 + $0x58] sm:$0xff]
    %v70 = vld [vmem:[#allocation2 + $0x60] sm:$0xff]
    %v71 = vld [vmem:[#allocation2 + $0x68] sm:$0xff]
    %v72 = vld [vmem:[#allocation2 + $0x70] sm:$0xff]
    %v73 = vld [vmem:[#allocation2 + $0x78] sm:$0xff]
    %v74 = vld [vmem:[#allocation2 + $0x80] sm:$0xff]
    %v75 = vld [vmem:[#allocation2 + $0x88] sm:$0xff]
    %v76 = vld [vmem:[#allocation2 + $0x90] sm:$0xff]
    %v77 = vld [vmem:[#allocation2 + $0x98] sm:$0xff]
    %v78 = vld [vmem:[#allocation2 + $0xa0] sm:$0xff]
    %v79 = vld [vmem:[#allocation2 + $0xa8] sm:$0xff]
    %v80 = vld [vmem:[#allocation2 + $0xb0] sm:$0xff]
    %v81 = vld [vmem:[#allocation2 + $0xb8] sm:$0xff]
    %v82 = vld [vmem:[#allocation2 + $0xc0] sm:$0xff]
    %v83 = vld [vmem:[#allocation2 + $0xc8] sm:$0xff]
    %v84 = vld [vmem:[#allocation2 + $0xd0] sm:$0xff]
    %v85 = vld [vmem:[#allocation2 + $0xd8] sm:$0xff]
    %v86 = vld [vmem:[#allocation2 + $0xe0] sm:$0xff]
    %v87 = vld [vmem:[#allocation2 + $0xe8] sm:$0xff]
    %v88 = vld [vmem:[#allocation2 + $0xf0] sm:$0xff]
    %v89 = vld [vmem:[#allocation2 + $0xf8] sm:$0xff]
    %v90 = vld [vmem:[#allocation2 + $0x100] sm:$0xff]
    %v91 = vld [vmem:[#allocation2 + $0x108] sm:$0xff]
    %v92 = vld [vmem:[#allocation2 + $0x110] sm:$0xff]
    %v93 = vld [vmem:[#allocation2 + $0x118] sm:$0xff]
    %v94 = vld [vmem:[#allocation2 + $0x120] sm:$0x1]
    %v95 = vld [vmem:[#allocation2 + $0x128] sm:$0x1]
    %v96 = vld [vmem:[#allocation2 + $0x130] sm:$0x1]
    %v97 = vld [vmem:[#allocation2 + $0x138] sm:$0x1]
    %v98 = vld [vmem:[#allocation2 + $0x140] sm:$0x1]
    %v99 = vld [vmem:[#allocation2 + $0x148] sm:$0x1]
    %v100 = vadd.f32 %v58, %v59
    %v101 = vadd.f32 %v100, %v60
    %v102 = vadd.f32 %v101, %v61
    %v103 = vadd.f32 %v102, %v62
    %v104 = vadd.f32 %v103, %v63
    %105 = vadd.xlane.f32.xlu0 %v104
    %v106 = vpop.xlane.xlu0 %105
    %v107 = vadd.f32 %v64, %v65
    %v108 = vadd.f32 %v107, %v66
    %v109 = vadd.f32 %v108, %v67
    %v110 = vadd.f32 %v109, %v68
    %v111 = vadd.f32 %v110, %v69
    %112 = vadd.xlane.f32.xlu0 %v111
    %v113 = vpop.xlane.xlu0 %112
    %v114 = vadd.f32 %v70, %v71
    %v115 = vadd.f32 %v114, %v72
    %v116 = vadd.f32 %v115, %v73
    %v117 = vadd.f32 %v116, %v74
    %v118 = vadd.f32 %v117, %v75
    %119 = vadd.xlane.f32.xlu0 %v118
    %v120 = vpop.xlane.xlu0 %119
    %v121 = vadd.f32 %v76, %v77
    %v122 = vadd.f32 %v121, %v78
    %v123 = vadd.f32 %v122, %v79
    %v124 = vadd.f32 %v123, %v80
    %v125 = vadd.f32 %v124, %v81
    %126 = vadd.xlane.f32.xlu0 %v125
    %v127 = vpop.xlane.xlu0 %126
    %v128 = vadd.f32 %v82, %v83
    %v129 = vadd.f32 %v128, %v84
    %v130 = vadd.f32 %v129, %v85
    %v131 = vadd.f32 %v130, %v86
    %v132 = vadd.f32 %v131, %v87
    %133 = vadd.xlane.f32.xlu0 %v132
    %v134 = vpop.xlane.xlu0 %133
    %v135 = vadd.f32 %v88, %v89
    %v136 = vadd.f32 %v135, %v90
    %v137 = vadd.f32 %v136, %v91
    %v138 = vadd.f32 %v137, %v92
    %v139 = vadd.f32 %v138, %v93
    %140 = vadd.xlane.f32.xlu0 %v139
    %v141 = vpop.xlane.xlu0 %140
    %vm142 = vcmask 1040384
    %v143 = vsel %vm142, %v94, 0.0
    %v144 = vsel %vm142, %v95, 0.0
    %v145 = vadd.f32 %v143, %v144
    %v146 = vsel %vm142, %v96, 0.0
    %v147 = vadd.f32 %v145, %v146
    %v148 = vsel %vm142, %v97, 0.0
    %v149 = vadd.f32 %v147, %v148
    %v150 = vsel %vm142, %v98, 0.0
    %v151 = vadd.f32 %v149, %v150
    %v152 = vsel %vm142, %v99, 0.0
    %v153 = vadd.f32 %v151, %v152
    %154 = vadd.xlane.f32.xlu0 %v153
    %v155 = vpop.xlane.xlu0 %154
    %v156 = vmul.f32 %v106, 0.0013020834
    %v157 = vmul.f32 %v113, 0.0013020834
    %v158 = vmul.f32 %v120, 0.0013020834
    %v159 = vmul.f32 %v127, 0.0013020834
    %v160 = vmul.f32 %v134, 0.0013020834
    %v161 = vmul.f32 %v141, 0.0013020834
    %v162 = vmul.f32 %v155, 0.0013020834
    %v163 = vsub.f32 %v58, %v156
    %v164 = vsub.f32 %v59, %v156
    %v165 = vsub.f32 %v60, %v156
    %v166 = vsub.f32 %v61, %v156
    %v167 = vsub.f32 %v62, %v156
    %v168 = vsub.f32 %v63, %v156
    %v169 = vsub.f32 %v64, %v157
    %v170 = vsub.f32 %v65, %v157
    %v171 = vsub.f32 %v66, %v157
    %v172 = vsub.f32 %v67, %v157
    %v173 = vsub.f32 %v68, %v157
    %v174 = vsub.f32 %v69, %v157
    %v175 = vsub.f32 %v70, %v158
    %v176 = vsub.f32 %v71, %v158
    %v177 = vsub.f32 %v72, %v158
    %v178 = vsub.f32 %v73, %v158
    %v179 = vsub.f32 %v74, %v158
    %v180 = vsub.f32 %v75, %v158
    %v181 = vsub.f32 %v76, %v159
    %v182 = vsub.f32 %v77, %v159
    %v183 = vsub.f32 %v78, %v159
    %v184 = vsub.f32 %v79, %v159
    %v185 = vsub.f32 %v80, %v159
    %v186 = vsub.f32 %v81, %v159
    %v187 = vsub.f32 %v82, %v160
    %v188 = vsub.f32 %v83, %v160
    %v189 = vsub.f32 %v84, %v160
    %v190 = vsub.f32 %v85, %v160
    %v191 = vsub.f32 %v86, %v160
    %v192 = vsub.f32 %v87, %v160
    %v193 = vsub.f32 %v88, %v161
    %v194 = vsub.f32 %v89, %v161
    %v195 = vsub.f32 %v90, %v161
    %v196 = vsub.f32 %v91, %v161
    %v197 = vsub.f32 %v92, %v161
    %v198 = vsub.f32 %v93, %v161
    %v199 = vsub.f32 %v94, %v162
    %v200 = vsub.f32 %v95, %v162
    %v201 = vsub.f32 %v96, %v162
    %v202 = vsub.f32 %v97, %v162
    %v203 = vsub.f32 %v98, %v162
    %v204 = vsub.f32 %v99, %v162
    %v205 = vmul.f32 %v163, %v163
    %v206 = vmul.f32 %v164, %v164
    %v207 = vmul.f32 %v165, %v165
    %v208 = vmul.f32 %v166, %v166
    %v209 = vmul.f32 %v167, %v167
    %v210 = vmul.f32 %v168, %v168
    %v211 = vmul.f32 %v169, %v169
    %v212 = vmul.f32 %v170, %v170
    %v213 = vmul.f32 %v171, %v171
    %v214 = vmul.f32 %v172, %v172
    %v215 = vmul.f32 %v173, %v173
    %v216 = vmul.f32 %v174, %v174
    %v217 = vmul.f32 %v175, %v175
    %v218 = vmul.f32 %v176, %v176
    %v219 = vmul.f32 %v177, %v177
    %v220 = vmul.f32 %v178, %v178
    %v221 = vmul.f32 %v179, %v179
    %v222 = vmul.f32 %v180, %v180
    %v223 = vmul.f32 %v181, %v181
    %v224 = vmul.f32 %v182, %v182
    %v225 = vmul.f32 %v183, %v183
    %v226 = vmul.f32 %v184, %v184
    %v227 = vmul.f32 %v185, %v185
    %v228 = vmul.f32 %v186, %v186
    %v229 = vmul.f32 %v187, %v187
    %v230 = vmul.f32 %v188, %v188
    %v231 = vmul.f32 %v189, %v189
    %v232 = vmul.f32 %v190, %v190
    %v233 = vmul.f32 %v191, %v191
    %v234 = vmul.f32 %v192, %v192
    %v235 = vmul.f32 %v193, %v193
    %v236 = vmul.f32 %v194, %v194
    %v237 = vmul.f32 %v195, %v195
    %v238 = vmul.f32 %v196, %v196
    %v239 = vmul.f32 %v197, %v197
    %v240 = vmul.f32 %v198, %v198
    %v241 = vmul.f32 %v199, %v199
    %v242 = vmul.f32 %v200, %v200
    %v243 = vmul.f32 %v201, %v201
    %v244 = vmul.f32 %v202, %v202
    %v245 = vmul.f32 %v203, %v203
    %v246 = vmul.f32 %v204, %v204
    %v247 = vadd.f32 %v205, %v206
    %v248 = vadd.f32 %v247, %v207
    %v249 = vadd.f32 %v248, %v208
    %v250 = vadd.f32 %v249, %v209
    %v251 = vadd.f32 %v250, %v210
    %252 = vadd.xlane.f32.xlu0 %v251
    %v253 = vpop.xlane.xlu0 %252
    %v254 = vadd.f32 %v211, %v212
    %v255 = vadd.f32 %v254, %v213
    %v256 = vadd.f32 %v255, %v214
    %v257 = vadd.f32 %v256, %v215
    %v258 = vadd.f32 %v257, %v216
    %259 = vadd.xlane.f32.xlu0 %v258
    %v260 = vpop.xlane.xlu0 %259
    %v261 = vadd.f32 %v217, %v218
    %v262 = vadd.f32 %v261, %v219
    %v263 = vadd.f32 %v262, %v220
    %v264 = vadd.f32 %v263, %v221
    %v265 = vadd.f32 %v264, %v222
    %266 = vadd.xlane.f32.xlu0 %v265
    %v267 = vpop.xlane.xlu0 %266
    %v268 = vadd.f32 %v223, %v224
    %v269 = vadd.f32 %v268, %v225
    %v270 = vadd.f32 %v269, %v226
    %v271 = vadd.f32 %v270, %v227
    %v272 = vadd.f32 %v271, %v228
    %273 = vadd.xlane.f32.xlu0 %v272
    %v274 = vpop.xlane.xlu0 %273
    %v275 = vadd.f32 %v229, %v230
    %v276 = vadd.f32 %v275, %v231
    %v277 = vadd.f32 %v276, %v232
    %v278 = vadd.f32 %v277, %v233
    %v279 = vadd.f32 %v278, %v234
    %280 = vadd.xlane.f32.xlu0 %v279
    %v281 = vpop.xlane.xlu0 %280
    %v282 = vadd.f32 %v235, %v236
    %v283 = vadd.f32 %v282, %v237
    %v284 = vadd.f32 %v283, %v238
    %v285 = vadd.f32 %v284, %v239
    %v286 = vadd.f32 %v285, %v240
    %287 = vadd.xlane.f32.xlu0 %v286
    %v288 = vpop.xlane.xlu0 %287
    %v289 = vsel %vm142, %v241, 0.0
    %v290 = vsel %vm142, %v242, 0.0
    %v291 = vadd.f32 %v289, %v290
    %v292 = vsel %vm142, %v243, 0.0
    %v293 = vadd.f32 %v291, %v292
    %v294 = vsel %vm142, %v244, 0.0
    %v295 = vadd.f32 %v293, %v294
    %v296 = vsel %vm142, %v245, 0.0
    %v297 = vadd.f32 %v295, %v296
    %v298 = vsel %vm142, %v246, 0.0
    %v299 = vadd.f32 %v297, %v298
    %300 = vadd.xlane.f32.xlu0 %v299
    %v301 = vpop.xlane.xlu0 %300
    %v302 = vmul.f32 %v253, 0.0013020834
    %v303 = vmul.f32 %v260, 0.0013020834
    %v304 = vmul.f32 %v267, 0.0013020834
    %v305 = vmul.f32 %v274, 0.0013020834
    %v306 = vmul.f32 %v281, 0.0013020834
    %v307 = vmul.f32 %v288, 0.0013020834
    %v308 = vmul.f32 %v301, 0.0013020834
    %v309 = vadd.f32 %v302, 1e-06
    %v310 = vadd.f32 %v303, 1e-06
    %v311 = vadd.f32 %v304, 1e-06
    %v312 = vadd.f32 %v305, 1e-06
    %v313 = vadd.f32 %v306, 1e-06
    %v314 = vadd.f32 %v307, 1e-06
    %v315 = vadd.f32 %v308, 1e-06
    %v316 = vrsqrt.pop %v309
    %v317 = vmul.f32 %v316, %v309
    %v318 = vmul.f32 %v317, %v316
    %v319 = vmul.f32 0.5, %v318
    %v320 = vsub.f32 1.5, %v319
    %v321 = vmul.f32 %v316, %v320
    %vm322 = vweird.f32 %v309
    %vm323 = vweird.f32 %v316
    %vm324 = vmor %vm322, %vm323
    %v325 = vsel %vm324, %v316, %v321
    %v326 = vrsqrt.pop %v310
    %v327 = vmul.f32 %v326, %v310
    %v328 = vmul.f32 %v327, %v326
    %v329 = vmul.f32 0.5, %v328
    %v330 = vsub.f32 1.5, %v329
    %v331 = vmul.f32 %v326, %v330
    %vm332 = vweird.f32 %v310
    %vm333 = vweird.f32 %v326
    %vm334 = vmor %vm332, %vm333
    %v335 = vsel %vm334, %v326, %v331
    %v336 = vrsqrt.pop %v311
    %v337 = vmul.f32 %v336, %v311
    %v338 = vmul.f32 %v337, %v336
    %v339 = vmul.f32 0.5, %v338
    %v340 = vsub.f32 1.5, %v339
    %v341 = vmul.f32 %v336, %v340
    %vm342 = vweird.f32 %v311
    %vm343 = vweird.f32 %v336
    %vm344 = vmor %vm342, %vm343
    %v345 = vsel %vm344, %v336, %v341
    %v346 = vrsqrt.pop %v312
    %v347 = vmul.f32 %v346, %v312
    %v348 = vmul.f32 %v347, %v346
    %v349 = vmul.f32 0.5, %v348
    %v350 = vsub.f32 1.5, %v349
    %v351 = vmul.f32 %v346, %v350
    %vm352 = vweird.f32 %v312
    %vm353 = vweird.f32 %v346
    %vm354 = vmor %vm352, %vm353
    %v355 = vsel %vm354, %v346, %v351
    %v356 = vrsqrt.pop %v313
    %v357 = vmul.f32 %v356, %v313
    %v358 = vmul.f32 %v357, %v356
    %v359 = vmul.f32 0.5, %v358
    %v360 = vsub.f32 1.5, %v359
    %v361 = vmul.f32 %v356, %v360
    %vm362 = vweird.f32 %v313
    %vm363 = vweird.f32 %v356
    %vm364 = vmor %vm362, %vm363
    %v365 = vsel %vm364, %v356, %v361
    %v366 = vrsqrt.pop %v314
    %v367 = vmul.f32 %v366, %v314
    %v368 = vmul.f32 %v367, %v366
    %v369 = vmul.f32 0.5, %v368
    %v370 = vsub.f32 1.5, %v369
    %v371 = vmul.f32 %v366, %v370
    %vm372 = vweird.f32 %v314
    %vm373 = vweird.f32 %v366
    %vm374 = vmor %vm372, %vm373
    %v375 = vsel %vm374, %v366, %v371
    %v376 = vrsqrt.pop %v315
    %v377 = vmul.f32 %v376, %v315
    %v378 = vmul.f32 %v377, %v376
    %v379 = vmul.f32 0.5, %v378
    %v380 = vsub.f32 1.5, %v379
    %v381 = vmul.f32 %v376, %v380
    %vm382 = vweird.f32 %v315
    %vm383 = vweird.f32 %v376
    %vm384 = vmor %vm382, %vm383
    %v385 = vsel %vm384, %v376, %v381
    %v386 = vld [vmem:[#allocation5] sm:$0x3f]
    %v387 = vld [vmem:[#allocation7] sm:$0x3f]
    %v388 = vmul.f32 %v163, %v325
    %v389 = vmul.f32 %v164, %v325
    %v390 = vmul.f32 %v165, %v325
    %v391 = vmul.f32 %v166, %v325
    %v392 = vmul.f32 %v167, %v325
    %v393 = vmul.f32 %v168, %v325
    %v394 = vmul.f32 %v169, %v335
    %v395 = vmul.f32 %v170, %v335
    %v396 = vmul.f32 %v171, %v335
    %v397 = vmul.f32 %v172, %v335
    %v398 = vmul.f32 %v173, %v335
    %v399 = vmul.f32 %v174, %v335
    %v400 = vmul.f32 %v175, %v345
    %v401 = vmul.f32 %v176, %v345
    %v402 = vmul.f32 %v177, %v345
    %v403 = vmul.f32 %v178, %v345
    %v404 = vmul.f32 %v179, %v345
    %v405 = vmul.f32 %v180, %v345
    %v406 = vmul.f32 %v181, %v355
    %v407 = vmul.f32 %v182, %v355
    %v408 = vmul.f32 %v183, %v355
    %v409 = vmul.f32 %v184, %v355
    %v410 = vmul.f32 %v185, %v355
    %v411 = vmul.f32 %v186, %v355
    %v412 = vmul.f32 %v187, %v365
    %v413 = vmul.f32 %v188, %v365
    %v414 = vmul.f32 %v189, %v365
    %v415 = vmul.f32 %v190, %v365
    %v416 = vmul.f32 %v191, %v365
    %v417 = vmul.f32 %v192, %v365
    %v418 = vmul.f32 %v193, %v375
    %v419 = vmul.f32 %v194, %v375
    %v420 = vmul.f32 %v195, %v375
    %v421 = vmul.f32 %v196, %v375
    %v422 = vmul.f32 %v197, %v375
    %v423 = vmul.f32 %v198, %v375
    %v424 = vmul.f32 %v199, %v385
    %v425 = vmul.f32 %v200, %v385
    %v426 = vmul.f32 %v201, %v385
    %v427 = vmul.f32 %v202, %v385
    %v428 = vmul.f32 %v203, %v385
    %v429 = vmul.f32 %v204, %v385
    %v431 = vperm.slane %v386, 0
    %v432 = vperm.slane %v386, 1
    %v433 = vperm.slane %v386, 2
    %v434 = vperm.slane %v386, 3
    %v435 = vperm.slane %v386, 4
    %v436 = vperm.slane %v386, 5
    %v443 = vmul.f32 %v388, %v431
    %v444 = vmul.f32 %v389, %v432
    %v445 = vmul.f32 %v390, %v433
    %v446 = vmul.f32 %v391, %v434
    %v447 = vmul.f32 %v392, %v435
    %v448 = vmul.f32 %v393, %v436
    %v449 = vmul.f32 %v394, %v431
    %v450 = vmul.f32 %v395, %v432
    %v451 = vmul.f32 %v396, %v433
    %v452 = vmul.f32 %v397, %v434
    %v453 = vmul.f32 %v398, %v435
    %v454 = vmul.f32 %v399, %v436
    %v455 = vmul.f32 %v400, %v431
    %v456 = vmul.f32 %v401, %v432
    %v457 = vmul.f32 %v402, %v433
    %v458 = vmul.f32 %v403, %v434
    %v459 = vmul.f32 %v404, %v435
    %v460 = vmul.f32 %v405, %v436
    %v461 = vmul.f32 %v406, %v431
    %v462 = vmul.f32 %v407, %v432
    %v463 = vmul.f32 %v408, %v433
    %v464 = vmul.f32 %v409, %v434
    %v465 = vmul.f32 %v410, %v435
    %v466 = vmul.f32 %v411, %v436
    %v467 = vmul.f32 %v412, %v431
    %v468 = vmul.f32 %v413, %v432
    %v469 = vmul.f32 %v414, %v433
    %v470 = vmul.f32 %v415, %v434
    %v471 = vmul.f32 %v416, %v435
    %v472 = vmul.f32 %v417, %v436
    %v473 = vmul.f32 %v418, %v431
    %v474 = vmul.f32 %v419, %v432
    %v475 = vmul.f32 %v420, %v433
    %v476 = vmul.f32 %v421, %v434
    %v477 = vmul.f32 %v422, %v435
    %v478 = vmul.f32 %v423, %v436
    %v479 = vmul.f32 %v424, %v431
    %v480 = vmul.f32 %v425, %v432
    %v481 = vmul.f32 %v426, %v433
    %v482 = vmul.f32 %v427, %v434
    %v483 = vmul.f32 %v428, %v435
    %v484 = vmul.f32 %v429, %v436
    %v486 = vperm.slane %v387, 0
    %v487 = vperm.slane %v387, 1
    %v488 = vperm.slane %v387, 2
    %v489 = vperm.slane %v387, 3
    %v490 = vperm.slane %v387, 4
    %v491 = vperm.slane %v387, 5
    %v498 = vadd.f32 %v443, %v486
    %v499 = vadd.f32 %v444, %v487
    %v500 = vadd.f32 %v445, %v488
    %v501 = vadd.f32 %v446, %v489
    %v502 = vadd.f32 %v447, %v490
    %v503 = vadd.f32 %v448, %v491
    %v504 = vadd.f32 %v449, %v486
    %v505 = vadd.f32 %v450, %v487
    %v506 = vadd.f32 %v451, %v488
    %v507 = vadd.f32 %v452, %v489
    %v508 = vadd.f32 %v453, %v490
    %v509 = vadd.f32 %v454, %v491
    %v510 = vadd.f32 %v455, %v486
    %v511 = vadd.f32 %v456, %v487
    %v512 = vadd.f32 %v457, %v488
    %v513 = vadd.f32 %v458, %v489
    %v514 = vadd.f32 %v459, %v490
    %v515 = vadd.f32 %v460, %v491
    %v516 = vadd.f32 %v461, %v486
    %v517 = vadd.f32 %v462, %v487
    %v518 = vadd.f32 %v463, %v488
    %v519 = vadd.f32 %v464, %v489
    %v520 = vadd.f32 %v465, %v490
    %v521 = vadd.f32 %v466, %v491
    %v522 = vadd.f32 %v467, %v486
    %v523 = vadd.f32 %v468, %v487
    %v524 = vadd.f32 %v469, %v488
    %v525 = vadd.f32 %v470, %v489
    %v526 = vadd.f32 %v471, %v490
    %v527 = vadd.f32 %v472, %v491
    %v528 = vadd.f32 %v473, %v486
    %v529 = vadd.f32 %v474, %v487
    %v530 = vadd.f32 %v475, %v488
    %v531 = vadd.f32 %v476, %v489
    %v532 = vadd.f32 %v477, %v490
    %v533 = vadd.f32 %v478, %v491
    %v534 = vadd.f32 %v479, %v486
    %v535 = vadd.f32 %v480, %v487
    %v536 = vadd.f32 %v481, %v488
    %v537 = vadd.f32 %v482, %v489
    %v538 = vadd.f32 %v483, %v490
    %v539 = vadd.f32 %v484, %v491
    %540 = vst [vmem:[#allocation8] sm:$0xff] %v498
    %541 = vst [vmem:[#allocation8 + $0x8] sm:$0xff] %v499
    %542 = vst [vmem:[#allocation8 + $0x10] sm:$0xff] %v500
    %543 = vst [vmem:[#allocation8 + $0x18] sm:$0xff] %v501
    %544 = vst [vmem:[#allocation8 + $0x20] sm:$0xff] %v502
    %545 = vst [vmem:[#allocation8 + $0x28] sm:$0xff] %v503
    %546 = vst [vmem:[#allocation8 + $0x30] sm:$0xff] %v504
    %547 = vst [vmem:[#allocation8 + $0x38] sm:$0xff] %v505
    %548 = vst [vmem:[#allocation8 + $0x40] sm:$0xff] %v506
    %549 = vst [vmem:[#allocation8 + $0x48] sm:$0xff] %v507
    %550 = vst [vmem:[#allocation8 + $0x50] sm:$0xff] %v508
    %551 = vst [vmem:[#allocation8 + $0x58] sm:$0xff] %v509
    %552 = vst [vmem:[#allocation8 + $0x60] sm:$0xff] %v510
    %553 = vst [vmem:[#allocation8 + $0x68] sm:$0xff] %v511
    %554 = vst [vmem:[#allocation8 + $0x70] sm:$0xff] %v512
    %555 = vst [vmem:[#allocation8 + $0x78] sm:$0xff] %v513
    %556 = vst [vmem:[#allocation8 + $0x80] sm:$0xff] %v514
    %557 = vst [vmem:[#allocation8 + $0x88] sm:$0xff] %v515
    %558 = vst [vmem:[#allocation8 + $0x90] sm:$0xff] %v516
    %559 = vst [vmem:[#allocation8 + $0x98] sm:$0xff] %v517
    %560 = vst [vmem:[#allocation8 + $0xa0] sm:$0xff] %v518
    %561 = vst [vmem:[#allocation8 + $0xa8] sm:$0xff] %v519
    %562 = vst [vmem:[#allocation8 + $0xb0] sm:$0xff] %v520
    %563 = vst [vmem:[#allocation8 + $0xb8] sm:$0xff] %v521
    %564 = vst [vmem:[#allocation8 + $0xc0] sm:$0xff] %v522
    %565 = vst [vmem:[#allocation8 + $0xc8] sm:$0xff] %v523
    %566 = vst [vmem:[#allocation8 + $0xd0] sm:$0xff] %v524
    %567 = vst [vmem:[#allocation8 + $0xd8] sm:$0xff] %v525
    %568 = vst [vmem:[#allocation8 + $0xe0] sm:$0xff] %v526
    %569 = vst [vmem:[#allocation8 + $0xe8] sm:$0xff] %v527
    %570 = vst [vmem:[#allocation8 + $0xf0] sm:$0xff] %v528
    %571 = vst [vmem:[#allocation8 + $0xf8] sm:$0xff] %v529
    %572 = vst [vmem:[#allocation8 + $0x100] sm:$0xff] %v530
    %573 = vst [vmem:[#allocation8 + $0x108] sm:$0xff] %v531
    %574 = vst [vmem:[#allocation8 + $0x110] sm:$0xff] %v532
    %575 = vst [vmem:[#allocation8 + $0x118] sm:$0xff] %v533
    %576 = vst [vmem:[#allocation8 + $0x120] sm:$0x1] %v534
    %577 = vst [vmem:[#allocation8 + $0x128] sm:$0x1] %v535
    %578 = vst [vmem:[#allocation8 + $0x130] sm:$0x1] %v536
    %579 = vst [vmem:[#allocation8 + $0x138] sm:$0x1] %v537
    %580 = vst [vmem:[#allocation8 + $0x140] sm:$0x1] %v538
    %581 = vst [vmem:[#allocation8 + $0x148] sm:$0x1] %v539
    // Predicated region
    $region26: #{tpu_custom_call.1} parent=1 // pred_check
      _
    $region27: #{tpu_custom_call.1} parent=1 // pred_check_branch
      %583 = sbr.rel (0) target = $region29
    $region28: #{tpu_custom_call.1} parent=1 // pred_region
      %585 = vsyncadd [#allocation4], 0
      %s586 = sshll.u32 [#allocation8], 4
      %s587 = int_to_ptr.vmem [resolvable:$true] %s586
      %s588 = sshll.u32 %s3, 4
      %s589 = int_to_ptr.hbm [resolvable:$true] %s588
      %594 = dma.vmem_to_hbm [thread:$0]  %s587, 5376, %s589, [#allocation4], 768, 768, 48
    $region29: #{tpu_custom_call.1} parent=1 // pred_fallthru
      _
    // Predicated region
    $region30: #{tpu_custom_call.1} parent=1 // pred_check
      _
    $region31: #{tpu_custom_call.1} parent=1 // pred_check_branch
      %596 = sbr.rel (0) target = $region33
    $region32: #{tpu_custom_call.1} parent=1 // pred_region
      %598 = dma.done [#allocation4], 5376
    $region33: #{tpu_custom_call.1} parent=1 // pred_fallthru
      _
    %599 = vsyncpa [#allocation3], 1
    %600 = vsyncpa [#allocation6], 1
    %601 = vsyncpa [#allocation4], 1

</llo_original>
